<compile_context>
chip_gen: v7x
topology: tpu7x:2x2x1
jax: 0.10.0
libtpu: 0.0.40
codegen_flags: <defaults>
</compile_context>

<pallas_src>
import jax
import jax.numpy as jnp
from jax import lax
from jax.experimental import pallas as pl
from jax.experimental.pallas import tpu as pltpu


def _round_up(n, m):
    return ((n + m - 1) // m) * m


def _largest_divisor_leq(n, cap):
    d = min(n, cap)
    while n % d != 0:
        d -= 1
    return d


def _pick_row_tile(total_rows, align, target):
    """Largest multiple of `align` <= target that divides total_rows."""
    t = max(align, (min(target, total_rows) // align) * align)
    while total_rows % t != 0:
        t -= align
    return t


# --------------------------------------------------------------------------
# Kernel 1: input projection u = x @ W_ih + (b_ih + b_hh), batched over rows.
# --------------------------------------------------------------------------
def input_proj_kernel(x_ref, wih_ref, b_ref, u_ref):
    u_ref[...] = (
        jnp.dot(x_ref[...], wih_ref[...], preferred_element_type=jnp.float32)
        + b_ref[...]
    ).astype(u_ref.dtype)


# --------------------------------------------------------------------------
# Kernel 2: serial recurrence h_t = tanh(h_{t-1} @ W_hh + u_t), CT steps/chunk.
# --------------------------------------------------------------------------
def rnn_recurrence_kernel(u_ref, h0_ref, whh_ref,   # inputs
                          hseq_ref,                 # output (per-step hidden)
                          h_scr):                   # VMEM carry (persists)
    @pl.when(pl.program_id(0) == 0)
    def _():
        h_scr[...] = h0_ref[...]

    whh = whh_ref[...]               # hoist the (hp, hp) weight read per chunk
    ct = u_ref.shape[0]              # static chunk length

    def step(t, h):
        h_new = jnp.tanh(
            jnp.dot(h, whh, preferred_element_type=jnp.float32) + u_ref[t]
        )
        hseq_ref[t] = h_new.astype(hseq_ref.dtype)
        return h_new

    # Hidden carried in vregs across the unrolled loop; one scratch read/write
    # per chunk instead of per step.
    h_scr[...] = lax.fori_loop(0, ct, step, h_scr[...], unroll=True)


# --------------------------------------------------------------------------
# Kernel 3: output projection + log-softmax, row-tiled.  Padded output lanes
# carry a -1e30 bias (pre-baked), so they vanish under exp() -- no mask input.
# --------------------------------------------------------------------------
def proj_logsoftmax_kernel(h_ref, who_ref, bho_ref, out_ref):
    logits = (
        jnp.dot(h_ref[...], who_ref[...], preferred_element_type=jnp.float32)
        + bho_ref[...]
    )
    m = jnp.max(logits, axis=-1, keepdims=True)
    shifted = logits - m
    lse = jnp.log(jnp.sum(jnp.exp(shifted), axis=-1, keepdims=True))
    out_ref[...] = (shifted - lse).astype(out_ref.dtype)


# --------------------------------------------------------------------------
# Parameter handling
# --------------------------------------------------------------------------
def init_params(key, input_size, hidden_size, output_size):
    """PyTorch-Linear-style init; weights stored pre-transposed (in, out),
    biases as (1, out) rows."""
    ks = jax.random.split(key, 6)

    def linear(kw, kb, fan_in, fan_out):
        bound = 1.0 / jnp.sqrt(jnp.float32(fan_in))
        w = jax.random.uniform(kw, (fan_in, fan_out), jnp.float32, -bound, bound)
        b = jax.random.uniform(kb, (1, fan_out), jnp.float32, -bound, bound)
        return w, b

    wih, bih = linear(ks[0], ks[1], input_size, hidden_size)
    whh, bhh = linear(ks[2], ks[3], hidden_size, hidden_size)
    who, bho = linear(ks[4], ks[5], hidden_size, output_size)
    return (wih, bih, whh, bhh, who, bho)


def pack_params(params, input_size, hidden_size, output_size):
    """Pad hidden/output to 128 lanes; keep the input width unpadded."""
    wih, bih, whh, bhh, who, bho = params
    hp = _round_up(hidden_size, 128)
    op = _round_up(output_size, 128)

    wih_p = jnp.zeros((input_size, hp), jnp.float32).at[:, :hidden_size].set(wih)
    bcat_p = jnp.zeros((1, hp), jnp.float32).at[:, :hidden_size].set(bih + bhh)
    whh_p = jnp.zeros((hp, hp), jnp.float32).at[:hidden_size, :hidden_size].set(whh)
    who_p = jnp.zeros((hp, op), jnp.float32).at[:hidden_size, :output_size].set(who)
    # Pre-bake the padded-lane mask into the output bias: padded logits come
    # out at -1e30 (padded who columns are zero), exact under log-softmax.
    bho_p = jnp.full((1, op), -1e30, jnp.float32).at[:, :output_size].set(bho)

    return dict(wih=wih_p, bcat=bcat_p, whh=whh_p, who=who_p, bho=bho_p,
                dims=(input_size, hidden_size, output_size, hp, op))


# --------------------------------------------------------------------------
# Forward wrappers
# --------------------------------------------------------------------------
def rnn_sequence_forward(x_seq, hidden0, packed, *, use_bf16=False,
                         row_tile=512, time_chunk=32):
    """Run T RNN steps. Returns (log_probs (T, B, out), final hidden (B, hid))."""
    input_size, hidden_size, output_size, hp, op = packed["dims"]
    T, batch, _ = x_seq.shape
    bp = _round_up(max(batch, 8), 8)
    R = T * bp

    align = 16 if use_bf16 else 8
    tile_r = _pick_row_tile(R, align, row_tile) if R % align == 0 else R
    ct = _largest_divisor_leq(T, time_chunk)
    mm_dtype = jnp.bfloat16 if use_bf16 else jnp.float32

    # Pad only the batch dim; the input feature dim keeps its true width.
    x_pad = jnp.zeros((T, bp, input_size), jnp.float32).at[:, :batch, :].set(x_seq)
    h0_pad = jnp.zeros((bp, hp), jnp.float32).at[:batch, :hidden_size].set(hidden0)
    x_flat = x_pad.reshape(R, input_size)

    # ---- Kernel 1: hoisted input projection (parallel, row-tiled). ----
    u_flat = pl.pallas_call(
        input_proj_kernel,
        out_shape=jax.ShapeDtypeStruct((R, hp), jnp.float32),
        grid_spec=pltpu.PrefetchScalarGridSpec(
            num_scalar_prefetch=0,
            grid=(R // tile_r,),
            in_specs=[
                pl.BlockSpec((tile_r, input_size), lambda r: (r, 0)),  # x rows
                pl.BlockSpec((input_size, hp), lambda r: (0, 0)),      # W_ih (resident)
                pl.BlockSpec((1, hp), lambda r: (0, 0)),               # b_ih+b_hh
            ],
            out_specs=pl.BlockSpec((tile_r, hp), lambda r: (r, 0)),
        ),
        compiler_params=pltpu.CompilerParams(
            dimension_semantics=("parallel",)),
    )(x_flat, packed["wih"], packed["bcat"])
    u_seq = u_flat.reshape(T, bp, hp)

    # ---- Kernel 2: serial recurrence, CT timesteps per grid step. ----
    # NOTE: time axis must remain "arbitrary"; the VMEM carry breaks otherwise.
    hseq = pl.pallas_call(
        rnn_recurrence_kernel,
        out_shape=jax.ShapeDtypeStruct((T, bp, hp), mm_dtype),
        grid_spec=pltpu.PrefetchScalarGridSpec(
            num_scalar_prefetch=0,
            grid=(T // ct,),
            in_specs=[
                pl.BlockSpec((ct, bp, hp), lambda c: (c, 0, 0)),   # u chunk
                pl.BlockSpec((bp, hp), lambda c: (0, 0)),          # h0 (resident)
                pl.BlockSpec((hp, hp), lambda c: (0, 0)),          # W_hh (resident)
            ],
            out_specs=pl.BlockSpec((ct, bp, hp), lambda c: (c, 0, 0)),
            scratch_shapes=[pltpu.VMEM((bp, hp), jnp.float32)],    # hidden carry
        ),
        compiler_params=pltpu.CompilerParams(
            dimension_semantics=("arbitrary",)),
    )(u_seq, h0_pad, packed["whh"])

    # ---- Kernel 3: output projection + log-softmax (parallel, row-tiled). ----
    h_flat = hseq.reshape(R, hp)
    who = packed["who"].astype(mm_dtype)
    logp_flat = pl.pallas_call(
        proj_logsoftmax_kernel,
        out_shape=jax.ShapeDtypeStruct((R, op), jnp.float32),
        grid_spec=pltpu.PrefetchScalarGridSpec(
            num_scalar_prefetch=0,
            grid=(R // tile_r,),
            in_specs=[
                pl.BlockSpec((tile_r, hp), lambda r: (r, 0)),      # hidden rows
                pl.BlockSpec((hp, op), lambda r: (0, 0)),          # W_ho (resident)
                pl.BlockSpec((1, op), lambda r: (0, 0)),           # b_ho (+ -1e30 pad)
            ],
            out_specs=pl.BlockSpec((tile_r, op), lambda r: (r, 0)),
        ),
        compiler_params=pltpu.CompilerParams(
            dimension_semantics=("parallel",)),
    )(h_flat, who, packed["bho"])

    log_probs = logp_flat.reshape(T, bp, op)[:, :batch, :output_size]
    hidden_final = hseq[T - 1, :batch, :hidden_size].astype(jnp.float32)
    return log_probs, hidden_final


def rnn_forward(x, hidden, packed, **kw):
    """Single-step API matching the PyTorch module forward: (output, hidden)."""
    log_probs, new_hidden = rnn_sequence_forward(x[None], hidden, packed, **kw)
    return log_probs[0], new_hidden


# --------------------------------------------------------------------------
if __name__ == "__main__":
    batch, T = 2, 12
    input_size = 64    # one-hot alphabet size (kept at true width, no lane pad)
    hidden_size = 32
    output_size = 16   # number of name categories

    key = jax.random.PRNGKey(0)
    k_params, k_x = jax.random.split(key)

    params = init_params(k_params, input_size, hidden_size, output_size)
    packed = pack_params(params, input_size, hidden_size, output_size)

    x_seq = jax.random.normal(k_x, (T, batch, input_size), jnp.float32)
    hidden0 = jnp.zeros((batch, hidden_size), jnp.float32)   # init_hidden()

    log_probs, hidden_final = rnn_sequence_forward(x_seq, hidden0, packed)
    jax.block_until_ready((log_probs, hidden_final))

    # Plain-JAX reference of the PyTorch forward, unrolled over the sequence.
    wih, bih, whh, bhh, who, bho = params
    h = hidden0
    lp_list = []
    for t in range(T):
        h = jnp.tanh(x_seq[t] @ wih + bih + h @ whh + bhh)
        lp_list.append(jax.nn.log_softmax(h @ who + bho, axis=1))
    lp_ref = jnp.stack(lp_list)

    assert jnp.allclose(log_probs, lp_ref, atol=2e-4), "log_probs mismatch"
    assert jnp.allclose(hidden_final, h, atol=2e-4), "hidden mismatch"

    # Single-step API matches the module forward semantics too.
    lp1, h1 = rnn_forward(x_seq[0], hidden0, packed)
    assert jnp.allclose(lp1, lp_ref[0], atol=2e-4), "single-step log_probs mismatch"
    h1_ref = jnp.tanh(x_seq[0] @ wih + bih + hidden0 @ whh + bhh)
    assert jnp.allclose(h1, h1_ref, atol=2e-4), "single-step hidden mismatch"

    # bf16 output-projection path (MXU bf16 + halved hseq traffic), loose tol.
    lp_bf, h_bf = rnn_sequence_forward(x_seq, hidden0, packed, use_bf16=True)
    jax.block_until_ready((lp_bf, h_bf))
    assert jnp.allclose(lp_bf, lp_ref, atol=5e-2), "bf16 log_probs mismatch"
    assert jnp.allclose(h_bf, h, atol=5e-2), "bf16 hidden mismatch"

    print("KERNEL_OK")
</pallas_src>

<mosaic_0001>
module attributes {stable_mosaic.version = 11 : i64} {
  func.func @input_proj_kernel(%arg0: i32, %arg1: memref<96x64xf32, #tpu.memory_space<vmem>>, %arg2: memref<64x128xf32, #tpu.memory_space<vmem>>, %arg3: memref<1x128xf32, #tpu.memory_space<vmem>>, %arg4: memref<96x128xf32, #tpu.memory_space<vmem>>) attributes {dimension_semantics = [#tpu.dimension_semantics<parallel>], iteration_bounds = array<i64: 1>, scalar_prefetch = 0 : i64, scratch_operands = 0 : i64, tpu.core_type = #tpu.core_type<tc>, window_params = [{transform_indices = @transform_0, window_bounds = array<i64: 96, 64>}, {pipeline_mode = #tpu.pipeline_mode<synchronous>, transform_indices = @transform_1, window_bounds = array<i64: 64, 128>}, {pipeline_mode = #tpu.pipeline_mode<synchronous>, transform_indices = @transform_2, window_bounds = array<i64: 1, 128>}, {transform_indices = @transform_3, window_bounds = array<i64: 96, 128>}]} {
    %c0 = arith.constant 0 : index
    %c0_0 = arith.constant 0 : index
    %0 = vector.load %arg1[%c0, %c0_0] : memref<96x64xf32, #tpu.memory_space<vmem>>, vector<96x64xf32>
    %c0_1 = arith.constant 0 : index
    %c0_2 = arith.constant 0 : index
    %1 = vector.load %arg2[%c0_1, %c0_2] : memref<64x128xf32, #tpu.memory_space<vmem>>, vector<64x128xf32>
    %cst = arith.constant dense<0.000000e+00> : vector<96x128xf32>
    %2 = tpu.matmul %0, %1, %cst {dimension_numbers = #tpu.dot_dimension_numbers<[1], [0], [0], [1], [0, 0, 1, 1], [], []>} : vector<96x64xf32>, vector<64x128xf32>, vector<96x128xf32> -> vector<96x128xf32>
    %c0_3 = arith.constant 0 : index
    %c0_4 = arith.constant 0 : index
    %3 = vector.load %arg3[%c0_3, %c0_4] : memref<1x128xf32, #tpu.memory_space<vmem>>, vector<1x128xf32>
    %4 = vector.broadcast %3 : vector<1x128xf32> to vector<96x128xf32>
    %5 = arith.addf %2, %4 : vector<96x128xf32>
    %c0_5 = arith.constant 0 : index
    %c0_6 = arith.constant 0 : index
    %6 = vector.load %arg4[%c0_5, %c0_6] : memref<96x128xf32, #tpu.memory_space<vmem>>, vector<96x128xf32>
    tpu.vector_store %arg4[%c0_5, %c0_6], %5 {strides = array<i32>} : memref<96x128xf32, #tpu.memory_space<vmem>>, vector<96x128xf32>,
    return
  }
  func.func @transform_0(%arg0: i32) -> (i32, i32) {
    %c0_i32 = arith.constant 0 : i32
    %c0_i32_0 = arith.constant 0 : i32
    return %arg0, %c0_i32 : i32, i32
  }
  func.func @transform_1(%arg0: i32) -> (i32, i32) {
    %c0_i32 = arith.constant 0 : i32
    %c0_i32_0 = arith.constant 0 : i32
    %c0_i32_1 = arith.constant 0 : i32
    return %c0_i32, %c0_i32_0 : i32, i32
  }
  func.func @transform_2(%arg0: i32) -> (i32, i32) {
    %c0_i32 = arith.constant 0 : i32
    %c0_i32_0 = arith.constant 0 : i32
    %c0_i32_1 = arith.constant 0 : i32
    return %c0_i32, %c0_i32_0 : i32, i32
  }
  func.func @transform_3(%arg0: i32) -> (i32, i32) {
    %c0_i32 = arith.constant 0 : i32
    %c0_i32_0 = arith.constant 0 : i32
    return %arg0, %c0_i32 : i32, i32
  }
}

</mosaic_0001>

<llo_original>
// kernel: tpu_custom_call.1
$region0: #{tpu_custom_call.1}
  #allocation0 [shape = 'u32[]', space=smem, size = 0x4, offset = 0x4, fixed_abs, tag = 'smem constant byte address 0x4 - core index']
  #allocation1 [shape = 'u32[144,128]{1,0:T(1,128)}', space=vmem, size = 0x12000, scoped, tag = 'internal scratch']
  %s0 = inlined_call_operand.vmem [shape: f32[96,64], index: 0, kind: input, shape index: {}]
  %s1 = inlined_call_operand.vmem [shape: f32[64,128], index: 1, kind: input, shape index: {}]
  %s2 = inlined_call_operand.vmem [shape: f32[1,128], index: 2, kind: input, shape index: {}]
  %s3 = inlined_call_operand.hbm [shape: f32[96,128], index: 3, kind: output, shape index: {}]
  %s4 = sld [smem:[#allocation0]]
  $region22: #{tpu_custom_call.1} parent=0
    _
  %s6 = ssub.s32 1, %s4
  %s7 = scalar_select 0, %s6, %s4
  $region1: #{tpu_custom_call.1} parent=0
    #allocation2 [shape = 'u8[49152]{0}', space=vmem, size = 0xc000, scoped, tag = 'output window, operand 0, single buffered']
    #allocation3 [shape = 's32[1]{0}', space=sflag, size = 0x4, scoped, tag = 'scoped memory for tpu_custom_call.1']
    %8 = vsyncpa [#allocation3], 0
    // Predicated region
    $region2: #{tpu_custom_call.1} parent=1 // pred_check
      _
    $region3: #{tpu_custom_call.1} parent=1 // pred_check_branch
      %10 = sbr.rel (0) target = $region5
    $region4: #{tpu_custom_call.1} parent=1 // pred_region
      _
    $region5: #{tpu_custom_call.1} parent=1 // pred_fallthru
      _
    // Predicated region
    $region6: #{tpu_custom_call.1} parent=1 // pred_check
      _
    $region7: #{tpu_custom_call.1} parent=1 // pred_check_branch
      %12 = sbr.rel (0) target = $region9
    $region8: #{tpu_custom_call.1} parent=1 // pred_region
      _
    $region9: #{tpu_custom_call.1} parent=1 // pred_fallthru
      _
    // Predicated region
    $region10: #{tpu_custom_call.1} parent=1 // pred_check
      _
    $region11: #{tpu_custom_call.1} parent=1 // pred_check_branch
      %14 = sbr.rel (0) target = $region13
    $region12: #{tpu_custom_call.1} parent=1 // pred_region
      _
    $region13: #{tpu_custom_call.1} parent=1 // pred_fallthru
      _
    %v15 = vld [vmem:[%s0] sm:$0xff]
    %v16 = vld [vmem:[%s0 + $0x8] sm:$0xff]
    %v17 = vld [vmem:[%s0 + $0x10] sm:$0xff]
    %v18 = vld [vmem:[%s0 + $0x18] sm:$0xff]
    %v19 = vld [vmem:[%s0 + $0x20] sm:$0xff]
    %v20 = vld [vmem:[%s0 + $0x28] sm:$0xff]
    %v21 = vld [vmem:[%s0 + $0x30] sm:$0xff]
    %v22 = vld [vmem:[%s0 + $0x38] sm:$0xff]
    %v23 = vld [vmem:[%s0 + $0x40] sm:$0xff]
    %v24 = vld [vmem:[%s0 + $0x48] sm:$0xff]
    %v25 = vld [vmem:[%s0 + $0x50] sm:$0xff]
    %v26 = vld [vmem:[%s0 + $0x58] sm:$0xff]
    %v27 = vld [vmem:[%s1] sm:$0xff]
    %v28 = vld [vmem:[%s1 + $0x8] sm:$0xff]
    %v29 = vld [vmem:[%s1 + $0x10] sm:$0xff]
    %v30 = vld [vmem:[%s1 + $0x18] sm:$0xff]
    %v31 = vld [vmem:[%s1 + $0x20] sm:$0xff]
    %v32 = vld [vmem:[%s1 + $0x28] sm:$0xff]
    %v33 = vld [vmem:[%s1 + $0x30] sm:$0xff]
    %v34 = vld [vmem:[%s1 + $0x38] sm:$0xff]
    %v35 = vld [vmem:[%s2] sm:$0x1]
    %v37 = vlaneseq
    %v38 = vshrl.u32 %v37, 7
    %v39 = vsub.s32 0, %v38
    %v40 = vrot.slane %v35, %v39
    %vm42 = vcmask 523264
    %v44 = vsel %vm42, %v15, 0
    %v47 = vsel %vm42, %v16, 0
    %v50 = vsel %vm42, %v17, 0
    %v53 = vsel %vm42, %v18, 0
    %v56 = vsel %vm42, %v19, 0
    %v59 = vsel %vm42, %v20, 0
    %v62 = vsel %vm42, %v21, 0
    %v65 = vsel %vm42, %v22, 0
    %v68 = vsel %vm42, %v23, 0
    %v71 = vsel %vm42, %v24, 0
    %v74 = vsel %vm42, %v25, 0
    %v77 = vsel %vm42, %v26, 0
    %79 = vmatprep.subr.mxu0 0.0
    %80 = vmatpush1.msra.mxu0 %v27
    %81 = vmatprep.subr.mxu0 0.0
    %82 = vmatpush1.msra.mxu0 %v28
    %83 = vmatprep.subr.mxu0 0.0
    %84 = vmatpush1.msra.mxu0 %v29
    %85 = vmatprep.subr.mxu0 0.0
    %86 = vmatpush1.msra.mxu0 %v30
    %87 = vmatprep.subr.mxu0 0.0
    %88 = vmatpush1.msra.mxu0 %v31
    %89 = vmatprep.subr.mxu0 0.0
    %90 = vmatpush1.msra.mxu0 %v32
    %91 = vmatprep.subr.mxu0 0.0
    %92 = vmatpush1.msra.mxu0 %v33
    %93 = vmatprep.subr.mxu0 0.0
    %94 = vmatpush1.msra.mxu0 %v34
    %95 = vmatprep.subr.mxu0 0.0
    %96 = vmatpush1.msra.mxu0 0.0
    %97 = vmatprep.subr.mxu0 0.0
    %98 = vmatpush1.msra.mxu0 0.0
    %99 = vmatprep.subr.mxu0 0.0
    %100 = vmatpush1.msra.mxu0 0.0
    %101 = vmatprep.subr.mxu0 0.0
    %102 = vmatpush1.msra.mxu0 0.0
    %103 = vmatprep.subr.mxu0 0.0
    %104 = vmatpush1.msra.mxu0 0.0
    %105 = vmatprep.subr.mxu0 0.0
    %106 = vmatpush1.msra.mxu0 0.0
    %107 = vmatprep.subr.mxu0 0.0
    %108 = vmatpush1.msra.mxu0 0.0
    %109 = vmatprep.subr.mxu0 0.0
    %110 = vmatpush1.msra.mxu0 0.0
    %111 = vmatprep.subr.mxu0 0.0
    %112 = vmatpush1.msra.mxu0 0.0
    %113 = vmatprep.subr.mxu0 0.0
    %114 = vmatpush1.msra.mxu0 0.0
    %115 = vmatprep.subr.mxu0 0.0
    %116 = vmatpush1.msra.mxu0 0.0
    %117 = vmatprep.subr.mxu0 0.0
    %118 = vmatpush1.msra.mxu0 0.0
    %119 = vmatprep.subr.mxu0 0.0
    %120 = vmatpush1.msra.mxu0 0.0
    %121 = vmatprep.subr.mxu0 0.0
    %122 = vmatpush1.msra.mxu0 0.0
    %123 = vmatprep.subr.mxu0 0.0
    %124 = vmatpush1.msra.mxu0 0.0
    %125 = vmatprep.subr.mxu0 0.0
    %126 = vmatpush1.msra.mxu0 0.0
    %127 = vmatprep.subr.mxu0 0.0
    %128 = vmatpush1.msra.mxu0 0.0
    %129 = vmatprep.subr.mxu0 0.0
    %130 = vmatpush1.msra.mxu0 0.0
    %131 = vmatprep.subr.mxu0 0.0
    %132 = vmatpush1.msra.mxu0 0.0
    %133 = vmatprep.subr.mxu0 0.0
    %134 = vmatpush1.msra.mxu0 0.0
    %135 = vmatprep.subr.mxu0 0.0
    %136 = vmatpush1.msra.mxu0 0.0
    %137 = vmatprep.subr.mxu0 0.0
    %138 = vmatpush1.msra.mxu0 0.0
    %139 = vmatprep.subr.mxu0 0.0
    %140 = vmatpush1.msra.mxu0 0.0
    %141 = vmatprep.subr.mxu0 0.0
    %142 = vmatpush1.msra.mxu0 0.0
    %143 = vmatprep.mubr.f32.mxu0 0.0
    %144 = vmatmul.mubr.f32.gmra.mrb[0].mxu0 %v44
    %v145 = vpop.f32.mrb[0].mxu0
    %v146 = vadd.f32 %v40, %v145
    %v147 = vpop.f32.mrb[0].mxu0
    %148 = vmatprep.mubr.f32.mxu0 0.0
    %149 = vmatmul.mubr.f32.gmra.mrb[0].mxu0 %v47
    %v150 = vpop.f32.mrb[0].mxu0
    %v151 = vadd.f32 %v40, %v150
    %v152 = vpop.f32.mrb[0].mxu0
    %153 = vmatprep.mubr.f32.mxu0 0.0
    %154 = vmatmul.mubr.f32.gmra.mrb[0].mxu0 %v50
    %v155 = vpop.f32.mrb[0].mxu0
    %v156 = vadd.f32 %v40, %v155
    %v157 = vpop.f32.mrb[0].mxu0
    %158 = vmatprep.mubr.f32.mxu0 0.0
    %159 = vmatmul.mubr.f32.gmra.mrb[0].mxu0 %v53
    %v160 = vpop.f32.mrb[0].mxu0
    %v161 = vadd.f32 %v40, %v160
    %v162 = vpop.f32.mrb[0].mxu0
    %163 = vmatprep.mubr.f32.mxu0 0.0
    %164 = vmatmul.mubr.f32.gmra.mrb[0].mxu0 %v56
    %v165 = vpop.f32.mrb[0].mxu0
    %v166 = vadd.f32 %v40, %v165
    %v167 = vpop.f32.mrb[0].mxu0
    %168 = vmatprep.mubr.f32.mxu0 0.0
    %169 = vmatmul.mubr.f32.gmra.mrb[0].mxu0 %v59
    %v170 = vpop.f32.mrb[0].mxu0
    %v171 = vadd.f32 %v40, %v170
    %v172 = vpop.f32.mrb[0].mxu0
    %173 = vmatprep.mubr.f32.mxu0 0.0
    %174 = vmatmul.mubr.f32.gmra.mrb[0].mxu0 %v62
    %v175 = vpop.f32.mrb[0].mxu0
    %v176 = vadd.f32 %v40, %v175
    %v177 = vpop.f32.mrb[0].mxu0
    %178 = vmatprep.mubr.f32.mxu0 0.0
    %179 = vmatmul.mubr.f32.gmra.mrb[0].mxu0 %v65
    %v180 = vpop.f32.mrb[0].mxu0
    %v181 = vadd.f32 %v40, %v180
    %v182 = vpop.f32.mrb[0].mxu0
    %183 = vmatprep.mubr.f32.mxu0 0.0
    %184 = vmatmul.mubr.f32.gmra.mrb[0].mxu0 %v68
    %v185 = vpop.f32.mrb[0].mxu0
    %v186 = vadd.f32 %v40, %v185
    %v187 = vpop.f32.mrb[0].mxu0
    %188 = vmatprep.mubr.f32.mxu0 0.0
    %189 = vmatmul.mubr.f32.gmra.mrb[0].mxu0 %v71
    %v190 = vpop.f32.mrb[0].mxu0
    %v191 = vadd.f32 %v40, %v190
    %v192 = vpop.f32.mrb[0].mxu0
    %193 = vmatprep.mubr.f32.mxu0 0.0
    %194 = vmatmul.mubr.f32.gmra.mrb[0].mxu0 %v74
    %v195 = vpop.f32.mrb[0].mxu0
    %v196 = vadd.f32 %v40, %v195
    %v197 = vpop.f32.mrb[0].mxu0
    %198 = vmatprep.mubr.f32.mxu0 0.0
    %199 = vmatmul.mubr.f32.gmra.mrb[0].mxu0 %v77
    %v200 = vpop.f32.mrb[0].mxu0
    %v201 = vadd.f32 %v40, %v200
    %v202 = vpop.f32.mrb[0].mxu0
    %203 = vdwg.mxu0
    %204 = vst [vmem:[#allocation2] sm:$0xff] %v146
    %205 = vst [vmem:[#allocation2 + $0x8] sm:$0xff] %v151
    %206 = vst [vmem:[#allocation2 + $0x10] sm:$0xff] %v156
    %207 = vst [vmem:[#allocation2 + $0x18] sm:$0xff] %v161
    %208 = vst [vmem:[#allocation2 + $0x20] sm:$0xff] %v166
    %209 = vst [vmem:[#allocation2 + $0x28] sm:$0xff] %v171
    %210 = vst [vmem:[#allocation2 + $0x30] sm:$0xff] %v176
    %211 = vst [vmem:[#allocation2 + $0x38] sm:$0xff] %v181
    %212 = vst [vmem:[#allocation2 + $0x40] sm:$0xff] %v186
    %213 = vst [vmem:[#allocation2 + $0x48] sm:$0xff] %v191
    %214 = vst [vmem:[#allocation2 + $0x50] sm:$0xff] %v196
    %215 = vst [vmem:[#allocation2 + $0x58] sm:$0xff] %v201
    // Predicated region
    $region14: #{tpu_custom_call.1} parent=1 // pred_check
      _
    $region15: #{tpu_custom_call.1} parent=1 // pred_check_branch
      %217 = sbr.rel (0) target = $region17
    $region16: #{tpu_custom_call.1} parent=1 // pred_region
      %s219 = ssub.s32 1536, 1536
      %220 = vsyncadd [#allocation3], %s219
      %s221 = sshll.u32 [#allocation2], 4
      %s222 = int_to_ptr.vmem [resolvable:$true] %s221
      %227 = dma.vmem_to_hbm [thread:$0]  %s222, 1536, %s3, [#allocation3], 128, 128, 8
    $region17: #{tpu_custom_call.1} parent=1 // pred_fallthru
      _
    // Predicated region
    $region18: #{tpu_custom_call.1} parent=1 // pred_check
      _
    $region19: #{tpu_custom_call.1} parent=1 // pred_check_branch
      %229 = sbr.rel (0) target = $region21
    $region20: #{tpu_custom_call.1} parent=1 // pred_region
      %230 = dma.done [#allocation3], 1536
    $region21: #{tpu_custom_call.1} parent=1 // pred_fallthru
      _
    %231 = vsyncpa [#allocation3], 1

</llo_original>
